<compile_context>
chip_gen: v7x
topology: tpu7x:2x2x1
jax: 0.10.0
libtpu: 0.0.40
codegen_flags: <defaults>
</compile_context>

<pallas_src>
import functools
import math

import jax
import jax.numpy as jnp
from jax import lax
from jax.experimental import pallas as pl
from jax.experimental.pallas import tpu as pltpu

EPS = 1e-4
NEG_SLOPE = 0.333
_MIB = 1024 * 1024


def _round_up(a, b):
    return -(-a // b) * b


def _sublane_granule(dtype):
    itemsize = jnp.dtype(dtype).itemsize
    return {1: 32, 2: 16}.get(itemsize, 8)


def _vmem_capacity_bytes():
    """Physical VMEM per TensorCore; conservative fallback if query fails."""
    try:
        info = pltpu.get_tpu_info()
        for name in ("vmem_capacity_bytes", "vmem_size_bytes", "vmem_bytes"):
            cap = getattr(info, name, None)
            if cap:
                return int(cap)
    except Exception:
        pass
    return 64 * _MIB  # v7x per-core VMEM (smallest of the three generations)


def _fold_groups(v, k, C):
    """v: (1, k*C) per-lane sums, lane = group*C + channel.

    Returns (1, k*C) where every lane holds its channel's total summed over the
    k folded row-groups, i.e. channel totals already replicated in the
    lane-folded layout.  Tiny data: (k-1) static lane-slice adds + one concat.
    """
    if k == 1:
        return v
    tot = v[:, 0:C]
    for j in range(1, k):
        tot = tot + v[:, j * C:(j + 1) * C]
    return jnp.concatenate([tot] * k, axis=1)


# ----------------------------------------------------------------------------
# Fused path: whole folded array resident in VMEM, single dispatch, x read once.
# ----------------------------------------------------------------------------
def _fused_kernel(x_ref, gamma_ref, beta_ref, o_ref, *, k, C, inv_n, chunk):
    R, L = x_ref.shape
    nchunks = R // chunk

    def stats_body(i, carry):
        s8, q8 = carry
        start = pl.multiple_of(i * chunk, chunk)
        x = x_ref[pl.ds(start, chunk), :].astype(jnp.float32)
        xr = x.reshape(chunk // 8, 8, L)
        # VALU-only accumulation into an (8, L) slab; cross-sublane reduce later.
        return s8 + jnp.sum(xr, axis=0), q8 + jnp.sum(xr * xr, axis=0)

    zero = jnp.zeros((8, L), jnp.float32)
    s8, q8 = lax.fori_loop(0, nchunks, stats_body, (zero, zero))

    sum_l = _fold_groups(jnp.sum(s8, axis=0, keepdims=True), k, C)   # (1, L)
    sq_l = _fold_groups(jnp.sum(q8, axis=0, keepdims=True), k, C)    # (1, L)
    mean = sum_l * inv_n
    var = jnp.maximum(sq_l * inv_n - mean * mean, 0.0)               # biased var
    scale = gamma_ref[...] * lax.rsqrt(var + EPS)                    # EUP rsqrt
    shift = beta_ref[...] - mean * scale

    def norm_body(i, carry):
        start = pl.multiple_of(i * chunk, chunk)
        x = x_ref[pl.ds(start, chunk), :].astype(jnp.float32)
        y = x * scale + shift
        o_ref[pl.ds(start, chunk), :] = jnp.where(
            y >= 0.0, y, NEG_SLOPE * y).astype(o_ref.dtype)
        return carry

    lax.fori_loop(0, nchunks, norm_body, 0)


# ----------------------------------------------------------------------------
# Streamed path (array too big for VMEM): stats pass + normalize pass.
# ----------------------------------------------------------------------------
def _stats_kernel(x_ref, sum_ref, sq_ref):
    """Accumulate per-lane sums into a core-resident (8, L) slab.

    grid = (2 cores, tiles_per_core): axis 0 is "parallel" so v7x's two
    TensorCores each own their own output slab; axis 1 is the sequential
    accumulation sweep.  Per-tile reduction is VALU adds only; the
    cross-sublane / cross-group fold happens once, outside the hot loop.
    """
    @pl.when(pl.program_id(1) == 0)
    def _():
        sum_ref[...] = jnp.zeros_like(sum_ref)
        sq_ref[...] = jnp.zeros_like(sq_ref)

    t, L = x_ref.shape
    x = x_ref[...].astype(jnp.float32)
    xr = x.reshape(t // 8, 8, L)
    sum_ref[...] += jnp.sum(xr, axis=0)
    sq_ref[...] += jnp.sum(xr * xr, axis=0)


def _norm_kernel(x_ref, scale_ref, shift_ref, o_ref):
    """y = x * scale + shift, then LeakyReLU(0.333); scale/shift resident."""
    x = x_ref[...].astype(jnp.float32)
    y = x * scale_ref[...] + shift_ref[...]
    o_ref[...] = jnp.where(y >= 0.0, y, NEG_SLOPE * y).astype(o_ref.dtype)


@functools.partial(jax.jit, static_argnames=("tile_rows", "allow_fused"))
def instance_norm_leaky_relu(features, gamma, beta, *, tile_rows=1024,
                             allow_fused=True):
    """features: (N, C); gamma/beta: (C,) BatchNorm1d affine params."""
    N, C = features.shape
    in_dtype = features.dtype
    itemsize = jnp.dtype(in_dtype).itemsize
    granule = _sublane_granule(in_dtype)

    # ---- lane-dense layout: fold k rows into the lane axis -------------------
    k = 128 // math.gcd(C, 128)
    if k <= 32:
        C_pad = C                      # zero channel padding (gcd fold)
    else:                              # pathological C: fall back to channel pad
        k = 1
        C_pad = _round_up(C, 128)
    L = k * C_pad
    R_min = max(1, -(-N // k))
    row_bytes = L * 4

    def rows_for(budget_bytes):
        return max(granule, (budget_bytes // row_bytes) // granule * granule)

    vmem_cap = _vmem_capacity_bytes()
    inv_n = 1.0 / N                    # true N: zero pad rows don't perturb sums

    # ---- affine params folded to the (1, L) lane layout (tiny) ---------------
    gamma_f = gamma.astype(jnp.float32)
    beta_f = beta.astype(jnp.float32)
    if C_pad != C:
        gamma_f = jnp.pad(gamma_f, (0, C_pad - C))
        beta_f = jnp.pad(beta_f, (0, C_pad - C))
    gamma_l = jnp.tile(gamma_f, (k,)).reshape(1, L)
    beta_l = jnp.tile(beta_f, (k,)).reshape(1, L)

    # ---- choose path & row tiling --------------------------------------------
    fused_chunk = min(rows_for(1 * _MIB), _round_up(R_min, granule))
    R_fused = _round_up(R_min, fused_chunk)
    fused_bytes = R_fused * L * (itemsize + itemsize)          # in + out blocks
    use_fused = allow_fused and fused_bytes <= int(0.45 * vmem_cap)

    if use_fused:
        R_pad, t = R_fused, fused_chunk
        tiles_per_core = 0
    else:
        t = min(tile_rows, rows_for(4 * _MIB), _round_up(R_min, granule))
        t = max(granule, (t // granule) * granule)
        tiles_per_core = max(1, -(-R_min // (2 * t)))
        R_pad = 2 * tiles_per_core * t
    N_pad = R_pad * k

    # ---- pad + fold (zeros contribute nothing to the sums) -------------------
    x = features
    if N_pad != N or C_pad != C:
        x = jnp.pad(x, ((0, N_pad - N), (0, C_pad - C)))
    x2 = x.reshape(R_pad, L)

    if use_fused:
        vmem_limit = int(min(0.9 * vmem_cap, fused_bytes + 16 * _MIB))
        out2 = pl.pallas_call(
            functools.partial(_fused_kernel, k=k, C=C_pad, inv_n=inv_n,
                              chunk=fused_chunk),
            out_shape=jax.ShapeDtypeStruct((R_pad, L), in_dtype),
            compiler_params=pltpu.CompilerParams(vmem_limit_bytes=vmem_limit),
        )(x2, gamma_l, beta_l)
    else:
        tile_bytes = t * L * 4
        vmem_limit = int(min(0.45 * vmem_cap, max(16 * _MIB, 12 * tile_bytes)))
        num_tiles = 2 * tiles_per_core

        # phase 0: per-lane sums; per-core (8, L) accumulator slabs.
        sums, sqs = pl.pallas_call(
            _stats_kernel,
            out_shape=(jax.ShapeDtypeStruct((16, L), jnp.float32),
                       jax.ShapeDtypeStruct((16, L), jnp.float32)),
            grid=(2, tiles_per_core),
            in_specs=[pl.BlockSpec((t, L),
                                   lambda c, i: (c * tiles_per_core + i, 0))],
            out_specs=(pl.BlockSpec((8, L), lambda c, i: (c, 0)),
                       pl.BlockSpec((8, L), lambda c, i: (c, 0))),
            compiler_params=pltpu.CompilerParams(
                dimension_semantics=("parallel", "arbitrary"),
                vmem_limit_bytes=vmem_limit),
        )(x2)

        # tiny epilogue on (C,)-sized data (negligible at streamed sizes; small
        # arrays take the fused path and have no epilogue at all).
        sum_l = jnp.sum(sums, axis=0)
        sq_l = jnp.sum(sqs, axis=0)
        if k > 1:
            sum_c = jnp.sum(sum_l.reshape(k, C_pad), axis=0)
            sq_c = jnp.sum(sq_l.reshape(k, C_pad), axis=0)
        else:
            sum_c, sq_c = sum_l, sq_l
        mean = sum_c * inv_n
        var = jnp.maximum(sq_c * inv_n - mean * mean, 0.0)     # biased variance
        scale_c = gamma_f * lax.rsqrt(var + EPS)
        shift_c = beta_f - mean * scale_c
        scale_l = jnp.tile(scale_c, (k,)).reshape(1, L)
        shift_l = jnp.tile(shift_c, (k,)).reshape(1, L)

        # phase 1: normalize + affine + LeakyReLU, parallel over row tiles.
        out2 = pl.pallas_call(
            _norm_kernel,
            out_shape=jax.ShapeDtypeStruct((R_pad, L), in_dtype),
            grid=(num_tiles,),
            in_specs=[pl.BlockSpec((t, L), lambda i: (i, 0)),
                      pl.BlockSpec((1, L), lambda i: (0, 0)),   # resident scale
                      pl.BlockSpec((1, L), lambda i: (0, 0))],  # resident shift
            out_specs=pl.BlockSpec((t, L), lambda i: (i, 0)),
            compiler_params=pltpu.CompilerParams(
                dimension_semantics=("parallel",),
                vmem_limit_bytes=vmem_limit),
        )(x2, scale_l, shift_l)

    out = out2.reshape(N_pad, C_pad)
    if N_pad != N or C_pad != C:
        out = out[:N, :C]
    return out


def _reference(features, gamma, beta):
    """Plain-JAX reference: BatchNorm1d(track_running_stats=False) + LeakyReLU(0.333)."""
    x = features.astype(jnp.float32)
    mean = jnp.mean(x, axis=0, keepdims=True)
    var = jnp.mean((x - mean) ** 2, axis=0, keepdims=True)   # biased variance
    y = (x - mean) / jnp.sqrt(var + EPS)
    y = y * gamma.reshape(1, -1) + beta.reshape(1, -1)
    return jnp.where(y >= 0.0, y, NEG_SLOPE * y).astype(features.dtype)


if __name__ == "__main__":
    key = jax.random.PRNGKey(0)

    def run_case(N, C, **kw):
        k1, k2, k3 = jax.random.split(jax.random.fold_in(key, N * 1000 + C), 3)
        feats = jax.random.normal(k1, (N, C), dtype=jnp.float32)
        gamma = 1.0 + 0.1 * jax.random.normal(k2, (C,), dtype=jnp.float32)
        beta = 0.1 * jax.random.normal(k3, (C,), dtype=jnp.float32)
        out = jax.block_until_ready(
            instance_norm_leaky_relu(feats, gamma, beta, **kw))
        ref = _reference(feats, gamma, beta)
        assert out.shape == (N, C)
        err = float(jnp.max(jnp.abs(out - ref)))
        assert err < 1e-4, f"mismatch vs reference ({N},{C}): {err}"

    # latent_dim=32: lane-fold k=4 -> L=128, fused single-dispatch path, no padding.
    run_case(64, 32)
    # latent_dim=48: gcd fold k=8 -> L=384 (zero channel pad), fused path + row padding.
    run_case(1000, 48)
    # Larger case with fusion disabled to exercise the streamed two-pass path
    # (dual-core stats accumulation + parallel normalize).
    run_case(4096, 48, tile_rows=128, allow_fused=False)

    # TODO(synk): the sparse-tensor container (x.features get/set) is plain Python
    # bookkeeping in the original module; only the feature-matrix math is kernelized.
    print("KERNEL_OK")
</pallas_src>

<mosaic_0001>
module attributes {stable_mosaic.version = 11 : i64} {
  func.func @_fused_kernel(%arg0: memref<16x128xf32, #tpu.memory_space<vmem>>, %arg1: memref<1x128xf32, #tpu.memory_space<vmem>>, %arg2: memref<1x128xf32, #tpu.memory_space<vmem>>, %arg3: memref<16x128xf32, #tpu.memory_space<vmem>>) attributes {dimension_semantics = [], scalar_prefetch = 0 : i64, scratch_operands = 0 : i64, tpu.core_type = #tpu.core_type<tc>} {
    %cst = arith.constant 0.000000e+00 : f32
    %0 = vector.broadcast %cst : f32 to vector<8x128xf32>
    %c0_i32 = arith.constant 0 : i32
    %c16_i32 = arith.constant 16 : i32
    %1 = arith.muli %c0_i32, %c16_i32 : i32
    %2 = tpu.assume_multiple %1, 16 : i32
    %3 = arith.index_cast %2 : i32 to index
    %c0 = arith.constant 0 : index
    %4 = vector.load %arg0[%3, %c0] : memref<16x128xf32, #tpu.memory_space<vmem>>, vector<16x128xf32>
    %5 = vector.shape_cast %4 : vector<16x128xf32> to vector<2x8x128xf32>
    %cst_0 = arith.constant dense<0.000000e+00> : vector<8x128xf32>
    %6 = vector.multi_reduction <add>, %5, %cst_0 [0] : vector<2x8x128xf32> to vector<8x128xf32>
    %7 = arith.addf %0, %6 : vector<8x128xf32>
    %8 = arith.mulf %5, %5 : vector<2x8x128xf32>
    %cst_1 = arith.constant dense<0.000000e+00> : vector<8x128xf32>
    %9 = vector.multi_reduction <add>, %8, %cst_1 [0] : vector<2x8x128xf32> to vector<8x128xf32>
    %10 = arith.addf %0, %9 : vector<8x128xf32>
    %c1_i32 = arith.constant 1 : i32
    %cst_2 = arith.constant dense<0.000000e+00> : vector<128xf32>
    %11 = vector.multi_reduction <add>, %7, %cst_2 [0] : vector<8x128xf32> to vector<128xf32>
    %12 = vector.shape_cast %11 : vector<128xf32> to vector<1x128xf32>
    %13 = vector.extract_strided_slice %12 {offsets = [0, 0], sizes = [1, 32], strides = [1, 1]} : vector<1x128xf32> to vector<1x32xf32>
    %14 = vector.extract_strided_slice %12 {offsets = [0, 32], sizes = [1, 32], strides = [1, 1]} : vector<1x128xf32> to vector<1x32xf32>
    %15 = arith.addf %13, %14 : vector<1x32xf32>
    %16 = vector.extract_strided_slice %12 {offsets = [0, 64], sizes = [1, 32], strides = [1, 1]} : vector<1x128xf32> to vector<1x32xf32>
    %17 = arith.addf %15, %16 : vector<1x32xf32>
    %18 = vector.extract_strided_slice %12 {offsets = [0, 96], sizes = [1, 32], strides = [1, 1]} : vector<1x128xf32> to vector<1x32xf32>
    %19 = arith.addf %17, %18 : vector<1x32xf32>
    %20 = tpu.concatenate %19, %19, %19, %19 in 1 : vector<1x32xf32>, vector<1x32xf32>, vector<1x32xf32>, vector<1x32xf32> -> vector<1x128xf32>
    %cst_3 = arith.constant dense<0.000000e+00> : vector<128xf32>
    %21 = vector.multi_reduction <add>, %10, %cst_3 [0] : vector<8x128xf32> to vector<128xf32>
    %22 = vector.shape_cast %21 : vector<128xf32> to vector<1x128xf32>
    %23 = vector.extract_strided_slice %22 {offsets = [0, 0], sizes = [1, 32], strides = [1, 1]} : vector<1x128xf32> to vector<1x32xf32>
    %24 = vector.extract_strided_slice %22 {offsets = [0, 32], sizes = [1, 32], strides = [1, 1]} : vector<1x128xf32> to vector<1x32xf32>
    %25 = arith.addf %23, %24 : vector<1x32xf32>
    %26 = vector.extract_strided_slice %22 {offsets = [0, 64], sizes = [1, 32], strides = [1, 1]} : vector<1x128xf32> to vector<1x32xf32>
    %27 = arith.addf %25, %26 : vector<1x32xf32>
    %28 = vector.extract_strided_slice %22 {offsets = [0, 96], sizes = [1, 32], strides = [1, 1]} : vector<1x128xf32> to vector<1x32xf32>
    %29 = arith.addf %27, %28 : vector<1x32xf32>
    %30 = tpu.concatenate %29, %29, %29, %29 in 1 : vector<1x32xf32>, vector<1x32xf32>, vector<1x32xf32>, vector<1x32xf32> -> vector<1x128xf32>
    %cst_4 = arith.constant 1.562500e-02 : f32
    %31 = vector.broadcast %cst_4 : f32 to vector<1x128xf32>
    %32 = arith.mulf %20, %31 : vector<1x128xf32>
    %cst_5 = arith.constant 1.562500e-02 : f32
    %33 = vector.broadcast %cst_5 : f32 to vector<1x128xf32>
    %34 = arith.mulf %30, %33 : vector<1x128xf32>
    %35 = arith.mulf %32, %32 : vector<1x128xf32>
    %36 = arith.subf %34, %35 : vector<1x128xf32>
    %cst_6 = arith.constant 0.000000e+00 : f32
    %37 = vector.broadcast %cst_6 : f32 to vector<1x128xf32>
    %38 = arith.maximumf %36, %37 : vector<1x128xf32>
    %c0_7 = arith.constant 0 : index
    %c0_8 = arith.constant 0 : index
    %39 = vector.load %arg1[%c0_7, %c0_8] : memref<1x128xf32, #tpu.memory_space<vmem>>, vector<1x128xf32>
    %cst_9 = arith.constant 9.99999974E-5 : f32
    %40 = vector.broadcast %cst_9 : f32 to vector<1x128xf32>
    %41 = arith.addf %38, %40 : vector<1x128xf32>
    %42 = math.rsqrt %41 : vector<1x128xf32>
    %43 = arith.mulf %39, %42 : vector<1x128xf32>
    %c0_10 = arith.constant 0 : index
    %c0_11 = arith.constant 0 : index
    %44 = vector.load %arg2[%c0_10, %c0_11] : memref<1x128xf32, #tpu.memory_space<vmem>>, vector<1x128xf32>
    %45 = arith.mulf %32, %43 : vector<1x128xf32>
    %46 = arith.subf %44, %45 : vector<1x128xf32>
    %c0_i32_12 = arith.constant 0 : i32
    %c16_i32_13 = arith.constant 16 : i32
    %47 = arith.muli %c0_i32_12, %c16_i32_13 : i32
    %48 = tpu.assume_multiple %47, 16 : i32
    %49 = arith.index_cast %48 : i32 to index
    %c0_14 = arith.constant 0 : index
    %50 = vector.load %arg0[%49, %c0_14] : memref<16x128xf32, #tpu.memory_space<vmem>>, vector<16x128xf32>
    %51 = vector.broadcast %43 : vector<1x128xf32> to vector<16x128xf32>
    %52 = arith.mulf %50, %51 : vector<16x128xf32>
    %53 = vector.broadcast %46 : vector<1x128xf32> to vector<16x128xf32>
    %54 = arith.addf %52, %53 : vector<16x128xf32>
    %cst_15 = arith.constant 0.000000e+00 : f32
    %55 = vector.broadcast %cst_15 : f32 to vector<16x128xf32>
    %56 = arith.cmpf oge, %54, %55 : vector<16x128xf32>
    %cst_16 = arith.constant 3.330000e-01 : f32
    %57 = vector.broadcast %cst_16 : f32 to vector<16x128xf32>
    %58 = arith.mulf %57, %54 : vector<16x128xf32>
    %59 = arith.select %56, %54, %58 : vector<16x128xi1>, vector<16x128xf32>
    %60 = arith.index_cast %48 : i32 to index
    %c0_17 = arith.constant 0 : index
    %61 = vector.load %arg3[%60, %c0_17] : memref<16x128xf32, #tpu.memory_space<vmem>>, vector<16x128xf32>
    tpu.vector_store %arg3[%60, %c0_17], %59 {strides = array<i32>} : memref<16x128xf32, #tpu.memory_space<vmem>>, vector<16x128xf32>,
    %c1_i32_18 = arith.constant 1 : i32
    return
  }
}

</mosaic_0001>

<llo_original>
// kernel: tile.14
$region0: #{tile.14}
  %s0 = inlined_call_operand.vmem [shape: f32[4,32], index: 0, kind: input, shape index: {}]
  %s1 = inlined_call_operand.vmem [shape: f32[1,128], index: 1, kind: output, shape index: {}]
  $region1: #{tile.14} parent=0
    #allocation0 [shape = 'u8[4096]{0}', space=vmem, size = 0x1000, scoped, tag = 'scoped mem for output reshape']
    #allocation1 [shape = 'u8[4096]{0}', space=vmem, size = 0x1000, scoped, tag = 'scoped mem for input reshape']
    %s3 = sshllo.u32 0, 4
    %v4 = vld [vmem:[%s0] sm:%s3]
    %5 = vst [vmem:[#allocation1] sm:%s3] %v4
    %v6 = vld [vmem:[#allocation1] sm:$0x1]
    %vm7 = vcmask 261120
    %8 = vst.msk [vmem:[#allocation0] sm:$0x1] %vm7, %v6
    %s9 = scalar_lea.vmem [#allocation1], 3
    %v10 = vld [vmem:[%s9] sm:$0x1]
    %11 = vrot.lane.b32.xlu0 %v10, 96
    %v12 = vpop.permute.xlu0 %11
    %vm13 = vcmask 1048320
    %14 = vst.msk [vmem:[#allocation0] sm:$0x1] %vm13, %v12
    %s15 = scalar_lea.vmem [#allocation1], 2
    %v16 = vld [vmem:[%s15] sm:$0x1]
    %17 = vrot.lane.b32.xlu0 %v16, 64
    %v18 = vpop.permute.xlu0 %17
    %vm19 = vcmask 785920
    %20 = vst.msk [vmem:[#allocation0] sm:$0x1] %vm19, %v18
    %s21 = scalar_lea.vmem [#allocation1], 1
    %v22 = vld [vmem:[%s21] sm:$0x1]
    %23 = vrot.lane.b32.xlu0 %v22, 32
    %v24 = vpop.permute.xlu0 %23
    %vm25 = vcmask 523520
    %26 = vst.msk [vmem:[#allocation0] sm:$0x1] %vm25, %v24
    %s28 = sshllo.u32 0, 1
    %v30 = vld [vmem:[#allocation0] sm:%s28]
    %s31 = sshllo.u32 0, 1
    %32 = vst [vmem:[%s1] sm:%s31] %v30

// kernel: tile.13
$region0: #{tile.13}
  #allocation0 [shape = 's32[1]{0}', space=sflag, size = 0x4, scoped, tag = 'scoped memory for tile.13']
  %s0 = inlined_call_operand.vmem [shape: f32[32], index: 0, kind: input, shape index: {}]
  %s1 = inlined_call_operand.vmem [shape: f32[4,32], index: 1, kind: output, shape index: {}]
  // Predicated region
  $region2: #{tile.13} parent=0 // pred_check
    _
  $region3: #{tile.13} parent=0 // pred_check_branch
    %3 = sbr.rel (0) target = $region5
  $region4: #{tile.13} parent=0 // pred_region
    _
  $region5: #{tile.13} parent=0 // pred_fallthru
    _
  %v4 = vld [vmem:[%s0] ss:$0 sm:$0xff]
  %5 = vst [vmem:[%s1] sm:$0xf] %v4

// kernel: instance_norm_leaky_relu.1
$region0: #{instance_norm_leaky_relu.1}
  #allocation0 [shape = 'u32[]', space=smem, size = 0x4, offset = 0x4, fixed_abs, tag = 'smem constant byte address 0x4 - core index']
  #allocation1 [shape = 'u32[144,128]{1,0:T(1,128)}', space=vmem, size = 0x12000, scoped, tag = 'internal scratch']
  %s0 = inlined_call_operand.vmem [shape: f32[16,128], index: 0, kind: input, shape index: {}]
  %s1 = inlined_call_operand.vmem [shape: f32[1,128], index: 1, kind: input, shape index: {}]
  %s2 = inlined_call_operand.vmem [shape: f32[1,128], index: 2, kind: input, shape index: {}]
  %s3 = inlined_call_operand.vmem [shape: f32[16,128], index: 3, kind: output, shape index: {}]
  %s4 = sld [smem:[#allocation0]]
  $region22: #{instance_norm_leaky_relu.1} parent=0
    _
  %s6 = ssub.s32 1, %s4
  %s7 = scalar_select 0, %s6, %s4
  // Predicated region
  $region2: #{instance_norm_leaky_relu.1} parent=0 // pred_check
    _
  $region3: #{instance_norm_leaky_relu.1} parent=0 // pred_check_branch
    %9 = sbr.rel (0) target = $region5
  $region4: #{instance_norm_leaky_relu.1} parent=0 // pred_region
    _
  $region5: #{instance_norm_leaky_relu.1} parent=0 // pred_fallthru
    _
  // Predicated region
  $region6: #{instance_norm_leaky_relu.1} parent=0 // pred_check
    _
  $region7: #{instance_norm_leaky_relu.1} parent=0 // pred_check_branch
    %11 = sbr.rel (0) target = $region9
  $region8: #{instance_norm_leaky_relu.1} parent=0 // pred_region
    _
  $region9: #{instance_norm_leaky_relu.1} parent=0 // pred_fallthru
    _
  // Predicated region
  $region10: #{instance_norm_leaky_relu.1} parent=0 // pred_check
    _
  $region11: #{instance_norm_leaky_relu.1} parent=0 // pred_check_branch
    %13 = sbr.rel (0) target = $region13
  $region12: #{instance_norm_leaky_relu.1} parent=0 // pred_region
    _
  $region13: #{instance_norm_leaky_relu.1} parent=0 // pred_fallthru
    _
  %v14 = vld [vmem:[%s0] sm:$0xff]
  %v15 = vld [vmem:[%s0 + $0x8] sm:$0xff]
  %v16 = vadd.f32 %v14, %v15
  %v17 = vadd.f32 %v16, 0.0
  %v18 = vmul.f32 %v14, %v14
  %v19 = vmul.f32 %v15, %v15
  %v20 = vadd.f32 %v18, %v19
  %v21 = vadd.f32 %v20, 0.0
  %v22 = vrot.slane %v17, 4
  %v23 = vadd.f32 %v17, %v22
  %v24 = vrot.slane %v23, 2
  %v25 = vadd.f32 %v23, %v24
  %v26 = vrot.slane %v25, 1
  %v27 = vadd.f32 %v25, %v26
  %29 = vrot.lane.b32.xlu0 %v27, 96
  %v30 = vpop.permute.xlu0 %29
  %v32 = vadd.f32 %v27, %v30
  %33 = vrot.lane.b32.xlu0 %v27, 64
  %v34 = vpop.permute.xlu0 %33
  %v36 = vadd.f32 %v32, %v34
  %37 = vrot.lane.b32.xlu0 %v27, 32
  %v38 = vpop.permute.xlu0 %37
  %v40 = vadd.f32 %v36, %v38
  %42 = vrot.lane.b32.xlu0 %v40, 32
  %v43 = vpop.permute.xlu0 %42
  %45 = vrot.lane.b32.xlu0 %v40, 64
  %v46 = vpop.permute.xlu0 %45
  %48 = vrot.lane.b32.xlu0 %v40, 96
  %v49 = vpop.permute.xlu0 %48
  %vm51 = vcmask 261120
  %v52 = vsel %vm51, %v40, %v43
  %vm53 = vcmask 523264
  %v54 = vsel %vm53, %v52, %v46
  %vm55 = vcmask 785408
  %v56 = vsel %vm55, %v54, %v49
  %v57 = vrot.slane %v21, 4
  %v58 = vadd.f32 %v21, %v57
  %v59 = vrot.slane %v58, 2
  %v60 = vadd.f32 %v58, %v59
  %v61 = vrot.slane %v60, 1
  %v62 = vadd.f32 %v60, %v61
  %64 = vrot.lane.b32.xlu0 %v62, 96
  %v65 = vpop.permute.xlu0 %64
  %v67 = vadd.f32 %v62, %v65
  %68 = vrot.lane.b32.xlu0 %v62, 64
  %v69 = vpop.permute.xlu0 %68
  %v71 = vadd.f32 %v67, %v69
  %72 = vrot.lane.b32.xlu0 %v62, 32
  %v73 = vpop.permute.xlu0 %72
  %v75 = vadd.f32 %v71, %v73
  %77 = vrot.lane.b32.xlu0 %v75, 32
  %v78 = vpop.permute.xlu0 %77
  %80 = vrot.lane.b32.xlu0 %v75, 64
  %v81 = vpop.permute.xlu0 %80
  %83 = vrot.lane.b32.xlu0 %v75, 96
  %v84 = vpop.permute.xlu0 %83
  %v86 = vsel %vm51, %v75, %v78
  %v87 = vsel %vm53, %v86, %v81
  %v88 = vsel %vm55, %v87, %v84
  %v89 = vmul.f32 %v56, 0.015625
  %v90 = vmul.f32 %v88, 0.015625
  %v91 = vmul.f32 %v89, %v89
  %v92 = vsub.f32 %v90, %v91
  %v93 = vmax.f32 %v92, 0.0
  %v94 = vld [vmem:[%s1] sm:$0x1]
  %v95 = vadd.f32 %v93, 0.0001
  %v96 = vrsqrt.pop %v95
  %v97 = vmul.f32 %v94, %v96
  %v98 = vld [vmem:[%s2] sm:$0x1]
  %v99 = vmul.f32 %v89, %v97
  %v100 = vsub.f32 %v98, %v99
  %v102 = vlaneseq
  %v103 = vshrl.u32 %v102, 7
  %v104 = vsub.s32 0, %v103
  %v105 = vrot.slane %v97, %v104
  %v107 = vmul.f32 %v14, %v105
  %v108 = vmul.f32 %v15, %v105
  %v110 = vlaneseq
  %v111 = vshrl.u32 %v110, 7
  %v112 = vsub.s32 0, %v111
  %v113 = vrot.slane %v100, %v112
  %v115 = vadd.f32 %v107, %v113
  %v116 = vadd.f32 %v108, %v113
  %vm117 = vcmp.ge.f32.partialorder %v115, 0.0
  %vm118 = vcmp.ge.f32.partialorder %v116, 0.0
  %v119 = vmul.f32 %v115, 0.333
  %v120 = vmul.f32 %v116, 0.333
  %v121 = vsel %vm117, %v115, %v119
  %v122 = vsel %vm118, %v116, %v120
  %123 = vst [vmem:[%s3] sm:$0xff] %v121
  %124 = vst [vmem:[%s3 + $0x8] sm:$0xff] %v122
  // Predicated region
  $region14: #{instance_norm_leaky_relu.1} parent=0 // pred_check
    _
  $region15: #{instance_norm_leaky_relu.1} parent=0 // pred_check_branch
    %126 = sbr.rel (0) target = $region17
  $region16: #{instance_norm_leaky_relu.1} parent=0 // pred_region
    _
  $region17: #{instance_norm_leaky_relu.1} parent=0 // pred_fallthru
    _
  // Predicated region
  $region18: #{instance_norm_leaky_relu.1} parent=0 // pred_check
    _
  $region19: #{instance_norm_leaky_relu.1} parent=0 // pred_check_branch
    %128 = sbr.rel (0) target = $region21
  $region20: #{instance_norm_leaky_relu.1} parent=0 // pred_region
    _
  $region21: #{instance_norm_leaky_relu.1} parent=0 // pred_fallthru
    _

</llo_original>
